<compile_context>
chip_gen: v6e
topology: v6e:2x2x1
jax: 0.10.0
libtpu: 0.0.40
codegen_flags: <defaults>
</compile_context>

<pallas_src>
import jax
import jax.numpy as jnp
from jax.experimental import pallas as pl
from jax.experimental.pallas import tpu as pltpu

LAYER_NORM_EPS = 1e-12  # FNetConfig default


# --------------------------------------------------------------------------- #
# helpers
# --------------------------------------------------------------------------- #
def _round_up(x, m):
    return ((x + m - 1) // m) * m


def _gelu_new(x):
    # HF "gelu_new" (tanh approximation)
    c = jnp.float32(0.7978845608028654)  # sqrt(2/pi)
    return 0.5 * x * (1.0 + jnp.tanh(c * (x + 0.044715 * (x * x * x))))


def _vmem_capacity_bytes():
    """Physical per-core VMEM; conservative 64 MiB (v7x) if undetectable."""
    try:
        info = pltpu.get_tpu_info()
        for attr in ("vmem_capacity_bytes", "vmem_size_bytes"):
            v = getattr(info, attr, None)
            if v:
                return int(v)
    except Exception:
        pass
    return 64 * 1024 * 1024


def _best_divisor_tile(n, cap):
    """Largest multiple of 128 <= cap dividing n (prefer multiples of 256)."""
    best128, best256 = 0, 0
    t = 128
    lim = min(n, cap)
    while t <= lim:
        if n % t == 0:
            best128 = t
            if t % 256 == 0:
                best256 = t
        t += 128
    return best256 or best128


def _pick_vocab_tile(V, vocab_tile):
    """Pick (tv, V_pad): a lane-dense tile that divides V (or padded V)."""
    cap = max(128, (vocab_tile // 128) * 128)
    tv = _best_divisor_tile(V, cap)
    if tv:
        return tv, V                       # no padding, no output slice copy
    V_pad = _round_up(V, 128)
    tv = _best_divisor_tile(V_pad, cap)
    if tv:
        return tv, V_pad
    tv = min(cap, V_pad)
    return tv, _round_up(V, tv)


def _vmem_footprint(tm, tv, H, isz_x, isz_dec, isz_out):
    """Double-buffered block footprint + persistent scratch (bytes)."""
    Hp = max(_round_up(H, 128), 128)
    tvp = max(_round_up(tv, 128), 128)
    return (2 * tm * H * isz_x            # x row tile
            + 2 * H * H * 4               # dense weight (f32)
            + 2 * 3 * 8 * Hp * 4          # b_dense / gamma / beta (tile-padded)
            + 2 * H * tv * isz_dec        # decoder weight tile (streamed)
            + 2 * 8 * tvp * 4             # decoder bias tile
            + 2 * tm * tv * isz_out       # output tile
            + tm * H * isz_dec)           # transform scratch


# --------------------------------------------------------------------------- #
# kernel
# --------------------------------------------------------------------------- #
def _make_lm_head_kernel(recompute_transform):
    """Grid = (row tiles, vocab tiles).

    recompute_transform=False: transform (dense + gelu_new + LayerNorm) is
      computed once per row tile (at vocab-tile 0) into a persistent VMEM
      scratch; vocab axis must stay sequential ("arbitrary").
    recompute_transform=True: transform recomputed every step (used when there
      is a single row tile) so the vocab axis can be megacore-parallel.
    """
    def kernel(x_ref, w1_ref, b1_ref, g_ref, beta_ref, w2_ref, b2_ref,
               out_ref, t_scratch):
        def transform():
            h = jnp.dot(x_ref[...], w1_ref[...],
                        preferred_element_type=jnp.float32) + b1_ref[...]
            h = _gelu_new(h)
            mu = jnp.mean(h, axis=-1, keepdims=True)
            var = jnp.mean((h - mu) * (h - mu), axis=-1, keepdims=True)
            h = (h - mu) * jax.lax.rsqrt(var + LAYER_NORM_EPS)
            h = h * g_ref[...] + beta_ref[...]
            t_scratch[...] = h.astype(t_scratch.dtype)

        if recompute_transform:
            transform()
        else:
            pl.when(pl.program_id(1) == 0)(transform)

        y = jnp.dot(t_scratch[...], w2_ref[...],
                    preferred_element_type=jnp.float32) + b2_ref[...]
        out_ref[...] = y.astype(out_ref.dtype)

    return kernel


# --------------------------------------------------------------------------- #
# one-time parameter preparation (hoisted pad + cast of the decoder weight)
# --------------------------------------------------------------------------- #
def prepare_params(params, *, vocab_tile=2048, use_bf16_decoder=True):
    """Pad/cast the decoder weight ONCE at init so per-call HBM traffic is
    only what the kernel itself streams."""
    H, V = params["w_dec"].shape
    tv, V_pad = _pick_vocab_tile(V, vocab_tile)
    dec_dtype = jnp.bfloat16 if use_bf16_decoder else jnp.float32

    w_dec = params["w_dec"]
    b_dec = params["b_dec"]
    if V_pad != V:
        w_dec = jnp.pad(w_dec, ((0, 0), (0, V_pad - V)))
        b_dec = jnp.pad(b_dec, (0, V_pad - V))

    return {
        "w_dense": params["w_dense"].astype(jnp.float32),
        "b_dense": params["b_dense"].astype(jnp.float32).reshape(1, H),
        "ln_gamma": params["ln_gamma"].astype(jnp.float32).reshape(1, H),
        "ln_beta": params["ln_beta"].astype(jnp.float32).reshape(1, H),
        "w_dec": w_dec.astype(dec_dtype),
        "b_dec": b_dec.astype(jnp.float32).reshape(1, V_pad),
        "meta": dict(H=H, V=V, V_pad=V_pad, tv=tv, dec_dtype=dec_dtype),
    }


# --------------------------------------------------------------------------- #
# wrapper
# --------------------------------------------------------------------------- #
def fnet_lm_prediction_head(hidden_states, params=None, *, prepared=None,
                            row_tile=1024, vocab_tile=2048,
                            use_bf16_decoder=True, logits_dtype=None):
    """hidden_states: (B, S, H). Either `params` (raw, (in,out)-transposed
    weights) or `prepared` (from prepare_params) must be given."""
    if prepared is None:
        if params is None:
            raise ValueError("need params or prepared")
        prepared = prepare_params(params, vocab_tile=vocab_tile,
                                  use_bf16_decoder=use_bf16_decoder)
    meta = prepared["meta"]
    H, V, V_pad, tv = meta["H"], meta["V"], meta["V_pad"], meta["tv"]
    dec_dtype = meta["dec_dtype"]

    B, S, Hx = hidden_states.shape
    assert Hx == H, "hidden size mismatch"
    M = B * S
    out_dtype = jnp.dtype(logits_dtype) if logits_dtype is not None \
        else hidden_states.dtype

    isz = lambda d: jnp.dtype(d).itemsize
    isz_x = isz(hidden_states.dtype)
    isz_dec = isz(dec_dtype)
    isz_out = isz(out_dtype)

    # ---- row tile: biggest that fits M and the per-generation VMEM budget ---
    usable_vmem = int(_vmem_capacity_bytes() * 0.8)   # leave compiler headroom
    tm = min(max(8, (row_tile // 8) * 8), _round_up(M, 8))
    while tm > 64 and _vmem_footprint(tm, tv, H, isz_x, isz_dec, isz_out) > usable_vmem:
        tm = max(64, ((tm // 2) // 8) * 8)
    M_pad = _round_up(M, tm)

    grid = (M_pad // tm, V_pad // tv)
    # Single row tile but several vocab tiles: recompute the (cheap) transform
    # per vocab tile so both axes can be megacore-parallel (v7x dual-TC).
    recompute_transform = (grid[0] == 1) and (grid[1] > 1)
    dim_sem = ("parallel", "parallel") if recompute_transform \
        else ("parallel", "arbitrary")

    # ---- operands -----------------------------------------------------------
    x2d = hidden_states.reshape(M, H)
    if M_pad != M:
        x2d = jnp.pad(x2d, ((0, M_pad - M), (0, 0)))

    # ---- VMEM limit sized from the actual tile footprint --------------------
    fp = _vmem_footprint(tm, tv, H, isz_x, isz_dec, isz_out)
    vmem_limit = int(min(_vmem_capacity_bytes(),
                         max(4 * 1024 * 1024, int(fp * 1.25) + (1 << 20))))

    # ---- advisory cost estimate (decoder weight counted once per row tile) --
    n_row_tiles = grid[0]
    n_transform = grid[1] if recompute_transform else 1
    cost = pl.CostEstimate(
        flops=int(2 * M_pad * H * H * n_transform + 2 * M_pad * H * V_pad),
        transcendentals=int(M_pad * H * n_transform),   # tanh in gelu_new
        bytes_accessed=int(
            M_pad * H * isz_x                              # activations in
            + H * H * 4 + 3 * H * 4                        # transform params
            + n_row_tiles * (H * V_pad * isz_dec + V_pad * 4)  # w_dec re-stream
            + M_pad * V_pad * isz_out),                    # logits out
    )

    out2d = pl.pallas_call(
        _make_lm_head_kernel(recompute_transform),
        out_shape=jax.ShapeDtypeStruct((M_pad, V_pad), out_dtype),
        grid_spec=pltpu.PrefetchScalarGridSpec(
            num_scalar_prefetch=0,
            grid=grid,
            in_specs=[
                pl.BlockSpec((tm, H), lambda i, j: (i, 0)),     # x row tile
                pl.BlockSpec((H, H), lambda i, j: (0, 0)),      # dense W
                pl.BlockSpec((1, H), lambda i, j: (0, 0)),      # dense b
                pl.BlockSpec((1, H), lambda i, j: (0, 0)),      # LN gamma
                pl.BlockSpec((1, H), lambda i, j: (0, 0)),      # LN beta
                pl.BlockSpec((H, tv), lambda i, j: (0, j)),     # decoder W tile
                pl.BlockSpec((1, tv), lambda i, j: (0, j)),     # decoder b tile
            ],
            out_specs=pl.BlockSpec((tm, tv), lambda i, j: (i, j)),
            scratch_shapes=[pltpu.VMEM((tm, H), dec_dtype)],
        ),
        compiler_params=pltpu.CompilerParams(
            dimension_semantics=dim_sem,
            vmem_limit_bytes=vmem_limit),
        cost_estimate=cost,
    )(x2d, prepared["w_dense"], prepared["b_dense"], prepared["ln_gamma"],
      prepared["ln_beta"], prepared["w_dec"], prepared["b_dec"])

    if M_pad != M or V_pad != V:
        out2d = out2d[:M, :V]
    return out2d.reshape(B, S, V)


# --------------------------------------------------------------------------- #
# pure-JAX reference
# --------------------------------------------------------------------------- #
def _reference(hidden_states, params):
    h = hidden_states @ params["w_dense"] + params["b_dense"]
    h = _gelu_new(h)
    mu = jnp.mean(h, axis=-1, keepdims=True)
    var = jnp.mean((h - mu) ** 2, axis=-1, keepdims=True)
    h = (h - mu) * jax.lax.rsqrt(var + LAYER_NORM_EPS)
    h = h * params["ln_gamma"] + params["ln_beta"]
    return h @ params["w_dec"] + params["b_dec"]


if __name__ == "__main__":
    # Small config: batch=2, seq=8, hidden=32, vocab=256
    B, S, H, V = 2, 8, 32, 256

    key = jax.random.PRNGKey(0)
    k_x, k_w1, k_w2 = jax.random.split(key, 3)

    hidden_states = jax.random.normal(k_x, (B, S, H), dtype=jnp.float32)

    params = {
        # stored pre-transposed: (in_features, out_features)
        "w_dense": 0.02 * jax.random.normal(k_w1, (H, H), dtype=jnp.float32),
        "b_dense": jnp.zeros((H,), jnp.float32),
        "ln_gamma": jnp.ones((H,), jnp.float32),
        "ln_beta": jnp.zeros((H,), jnp.float32),
        "w_dec": 0.02 * jax.random.normal(k_w2, (H, V), dtype=jnp.float32),
        "b_dec": jnp.zeros((V,), jnp.float32),   # == self.bias (tied to decoder.bias)
    }

    ref = _reference(hidden_states, params)

    # 1) Exact mode: full-f32 decoder path, f32 logits (matches PyTorch tightly).
    prep_f32 = prepare_params(params, use_bf16_decoder=False)
    out_f32 = fnet_lm_prediction_head(hidden_states, prepared=prep_f32)
    out_f32 = jax.block_until_ready(out_f32)
    assert out_f32.shape == (B, S, V)
    assert jnp.allclose(out_f32, ref, atol=1e-4, rtol=1e-4), "f32 mismatch vs reference"

    # 2) Fast mode (default): bf16 decoder weights/activations + bf16 logits,
    #    f32 MXU accumulation; weights pre-cast/padded once by prepare_params.
    prep_fast = prepare_params(params, use_bf16_decoder=True)
    out_fast = fnet_lm_prediction_head(hidden_states, prepared=prep_fast,
                                       logits_dtype=jnp.bfloat16)
    out_fast = jax.block_until_ready(out_fast)
    assert out_fast.shape == (B, S, V)
    assert out_fast.dtype == jnp.bfloat16
    assert jnp.allclose(out_fast.astype(jnp.float32), ref,
                        atol=3e-2, rtol=3e-2), "bf16 mismatch vs reference"

    # 3) Multi-vocab-tile / single-row-tile path: exercises the
    #    recompute-transform variant with both grid axes parallel.
    prep_small = prepare_params(params, vocab_tile=128, use_bf16_decoder=False)
    out_small = fnet_lm_prediction_head(hidden_states, prepared=prep_small)
    out_small = jax.block_until_ready(out_small)
    assert out_small.shape == (B, S, V)
    assert jnp.allclose(out_small, ref, atol=1e-4, rtol=1e-4), \
        "multi-vocab-tile mismatch vs reference"

    print("KERNEL_OK")
</pallas_src>

<mosaic_0001>
module attributes {stable_mosaic.version = 11 : i64} {
  func.func @kernel(%arg0: i32, %arg1: i32, %arg2: memref<16x32xf32, #tpu.memory_space<vmem>>, %arg3: memref<32x32xf32, #tpu.memory_space<vmem>>, %arg4: memref<1x32xf32, #tpu.memory_space<vmem>>, %arg5: memref<1x32xf32, #tpu.memory_space<vmem>>, %arg6: memref<1x32xf32, #tpu.memory_space<vmem>>, %arg7: memref<32x256xf32, #tpu.memory_space<vmem>>, %arg8: memref<1x256xf32, #tpu.memory_space<vmem>>, %arg9: memref<16x256xf32, #tpu.memory_space<vmem>>, %arg10: memref<16x32xf32, #tpu.memory_space<vmem>>) attributes {dimension_semantics = [#tpu.dimension_semantics<parallel>, #tpu.dimension_semantics<arbitrary>], iteration_bounds = array<i64: 1, 1>, scalar_prefetch = 0 : i64, scratch_operands = 1 : i64, tpu.core_type = #tpu.core_type<tc>, window_params = [{transform_indices = @transform_0, window_bounds = array<i64: 16, 32>}, {pipeline_mode = #tpu.pipeline_mode<synchronous>, transform_indices = @transform_1, window_bounds = array<i64: 32, 32>}, {pipeline_mode = #tpu.pipeline_mode<synchronous>, transform_indices = @transform_2, window_bounds = array<i64: 1, 32>}, {pipeline_mode = #tpu.pipeline_mode<synchronous>, transform_indices = @transform_3, window_bounds = array<i64: 1, 32>}, {pipeline_mode = #tpu.pipeline_mode<synchronous>, transform_indices = @transform_4, window_bounds = array<i64: 1, 32>}, {transform_indices = @transform_5, window_bounds = array<i64: 32, 256>}, {transform_indices = @transform_6, window_bounds = array<i64: 1, 256>}, {transform_indices = @transform_7, window_bounds = array<i64: 16, 256>}]} {
    %c0_i32 = arith.constant 0 : i32
    %0 = arith.cmpi eq, %arg1, %c0_i32 : i32
    %1 = arith.extui %0 : i1 to i32
    %c0_i32_0 = arith.constant 0 : i32
    %2 = arith.cmpi ne, %1, %c0_i32_0 : i32
    scf.if %2 {
      %c0_8 = arith.constant 0 : index
      %c0_9 = arith.constant 0 : index
      %10 = vector.load %arg2[%c0_8, %c0_9] : memref<16x32xf32, #tpu.memory_space<vmem>>, vector<16x32xf32>
      %c0_10 = arith.constant 0 : index
      %c0_11 = arith.constant 0 : index
      %11 = vector.load %arg3[%c0_10, %c0_11] : memref<32x32xf32, #tpu.memory_space<vmem>>, vector<32x32xf32>
      %cst_12 = arith.constant dense<0.000000e+00> : vector<16x32xf32>
      %12 = tpu.matmul %10, %11, %cst_12 {dimension_numbers = #tpu.dot_dimension_numbers<[1], [0], [0], [1], [0, 0, 1, 1], [], []>} : vector<16x32xf32>, vector<32x32xf32>, vector<16x32xf32> -> vector<16x32xf32>
      %c0_13 = arith.constant 0 : index
      %c0_14 = arith.constant 0 : index
      %13 = vector.load %arg4[%c0_13, %c0_14] : memref<1x32xf32, #tpu.memory_space<vmem>>, vector<1x32xf32>
      %14 = vector.broadcast %13 : vector<1x32xf32> to vector<16x32xf32>
      %15 = arith.addf %12, %14 : vector<16x32xf32>
      %cst_15 = arith.constant 5.000000e-01 : f32
      %16 = vector.broadcast %cst_15 : f32 to vector<16x32xf32>
      %17 = arith.mulf %16, %15 : vector<16x32xf32>
      %18 = arith.mulf %15, %15 : vector<16x32xf32>
      %19 = arith.mulf %18, %15 : vector<16x32xf32>
      %cst_16 = arith.constant 4.471500e-02 : f32
      %20 = vector.broadcast %cst_16 : f32 to vector<16x32xf32>
      %21 = arith.mulf %20, %19 : vector<16x32xf32>
      %22 = arith.addf %15, %21 : vector<16x32xf32>
      %cst_17 = arith.constant 0.797884583 : f32
      %23 = vector.broadcast %cst_17 : f32 to vector<16x32xf32>
      %24 = arith.mulf %23, %22 : vector<16x32xf32>
      %25 = math.tanh %24 : vector<16x32xf32>
      %cst_18 = arith.constant 1.000000e+00 : f32
      %26 = vector.broadcast %cst_18 : f32 to vector<16x32xf32>
      %27 = arith.addf %26, %25 : vector<16x32xf32>
      %28 = arith.mulf %17, %27 : vector<16x32xf32>
      %cst_19 = arith.constant dense<0.000000e+00> : vector<16xf32>
      %29 = vector.multi_reduction <add>, %28, %cst_19 [1] : vector<16x32xf32> to vector<16xf32>
      %30 = vector.shape_cast %29 : vector<16xf32> to vector<16x1xf32>
      %cst_20 = arith.constant 3.200000e+01 : f32
      %31 = vector.broadcast %cst_20 : f32 to vector<16x1xf32>
      %32 = arith.divf %30, %31 : vector<16x1xf32>
      %33 = vector.broadcast %32 : vector<16x1xf32> to vector<16x32xf32>
      %34 = arith.subf %28, %33 : vector<16x32xf32>
      %35 = vector.broadcast %32 : vector<16x1xf32> to vector<16x32xf32>
      %36 = arith.subf %28, %35 : vector<16x32xf32>
      %37 = arith.mulf %34, %36 : vector<16x32xf32>
      %cst_21 = arith.constant dense<0.000000e+00> : vector<16xf32>
      %38 = vector.multi_reduction <add>, %37, %cst_21 [1] : vector<16x32xf32> to vector<16xf32>
      %39 = vector.shape_cast %38 : vector<16xf32> to vector<16x1xf32>
      %cst_22 = arith.constant 3.200000e+01 : f32
      %40 = vector.broadcast %cst_22 : f32 to vector<16x1xf32>
      %41 = arith.divf %39, %40 : vector<16x1xf32>
      %42 = vector.broadcast %32 : vector<16x1xf32> to vector<16x32xf32>
      %43 = arith.subf %28, %42 : vector<16x32xf32>
      %cst_23 = arith.constant 9.99999996E-13 : f32
      %44 = vector.broadcast %cst_23 : f32 to vector<16x1xf32>
      %45 = arith.addf %41, %44 : vector<16x1xf32>
      %46 = math.rsqrt %45 : vector<16x1xf32>
      %47 = vector.broadcast %46 : vector<16x1xf32> to vector<16x32xf32>
      %48 = arith.mulf %43, %47 : vector<16x32xf32>
      %c0_24 = arith.constant 0 : index
      %c0_25 = arith.constant 0 : index
      %49 = vector.load %arg5[%c0_24, %c0_25] : memref<1x32xf32, #tpu.memory_space<vmem>>, vector<1x32xf32>
      %50 = vector.broadcast %49 : vector<1x32xf32> to vector<16x32xf32>
      %51 = arith.mulf %48, %50 : vector<16x32xf32>
      %c0_26 = arith.constant 0 : index
      %c0_27 = arith.constant 0 : index
      %52 = vector.load %arg6[%c0_26, %c0_27] : memref<1x32xf32, #tpu.memory_space<vmem>>, vector<1x32xf32>
      %53 = vector.broadcast %52 : vector<1x32xf32> to vector<16x32xf32>
      %54 = arith.addf %51, %53 : vector<16x32xf32>
      %c0_28 = arith.constant 0 : index
      %c0_29 = arith.constant 0 : index
      %55 = vector.load %arg10[%c0_28, %c0_29] : memref<16x32xf32, #tpu.memory_space<vmem>>, vector<16x32xf32>
      tpu.vector_store %arg10[%c0_28, %c0_29], %54 {strides = array<i32>} : memref<16x32xf32, #tpu.memory_space<vmem>>, vector<16x32xf32>,
    } else {
    }
    %c0 = arith.constant 0 : index
    %c0_1 = arith.constant 0 : index
    %3 = vector.load %arg10[%c0, %c0_1] : memref<16x32xf32, #tpu.memory_space<vmem>>, vector<16x32xf32>
    %c0_2 = arith.constant 0 : index
    %c0_3 = arith.constant 0 : index
    %4 = vector.load %arg7[%c0_2, %c0_3] : memref<32x256xf32, #tpu.memory_space<vmem>>, vector<32x256xf32>
    %cst = arith.constant dense<0.000000e+00> : vector<16x256xf32>
    %5 = tpu.matmul %3, %4, %cst {dimension_numbers = #tpu.dot_dimension_numbers<[1], [0], [0], [1], [0, 0, 1, 1], [], []>} : vector<16x32xf32>, vector<32x256xf32>, vector<16x256xf32> -> vector<16x256xf32>
    %c0_4 = arith.constant 0 : index
    %c0_5 = arith.constant 0 : index
    %6 = vector.load %arg8[%c0_4, %c0_5] : memref<1x256xf32, #tpu.memory_space<vmem>>, vector<1x256xf32>
    %7 = vector.broadcast %6 : vector<1x256xf32> to vector<16x256xf32>
    %8 = arith.addf %5, %7 : vector<16x256xf32>
    %c0_6 = arith.constant 0 : index
    %c0_7 = arith.constant 0 : index
    %9 = vector.load %arg9[%c0_6, %c0_7] : memref<16x256xf32, #tpu.memory_space<vmem>>, vector<16x256xf32>
    tpu.vector_store %arg9[%c0_6, %c0_7], %8 {strides = array<i32>} : memref<16x256xf32, #tpu.memory_space<vmem>>, vector<16x256xf32>,
    return
  }
  func.func @transform_0(%arg0: i32, %arg1: i32) -> (i32, i32) {
    %c0_i32 = arith.constant 0 : i32
    %c0_i32_0 = arith.constant 0 : i32
    return %arg0, %c0_i32 : i32, i32
  }
  func.func @transform_1(%arg0: i32, %arg1: i32) -> (i32, i32) {
    %c0_i32 = arith.constant 0 : i32
    %c0_i32_0 = arith.constant 0 : i32
    %c0_i32_1 = arith.constant 0 : i32
    return %c0_i32, %c0_i32_0 : i32, i32
  }
  func.func @transform_2(%arg0: i32, %arg1: i32) -> (i32, i32) {
    %c0_i32 = arith.constant 0 : i32
    %c0_i32_0 = arith.constant 0 : i32
    %c0_i32_1 = arith.constant 0 : i32
    return %c0_i32, %c0_i32_0 : i32, i32
  }
  func.func @transform_3(%arg0: i32, %arg1: i32) -> (i32, i32) {
    %c0_i32 = arith.constant 0 : i32
    %c0_i32_0 = arith.constant 0 : i32
    %c0_i32_1 = arith.constant 0 : i32
    return %c0_i32, %c0_i32_0 : i32, i32
  }
  func.func @transform_4(%arg0: i32, %arg1: i32) -> (i32, i32) {
    %c0_i32 = arith.constant 0 : i32
    %c0_i32_0 = arith.constant 0 : i32
    %c0_i32_1 = arith.constant 0 : i32
    return %c0_i32, %c0_i32_0 : i32, i32
  }
  func.func @transform_5(%arg0: i32, %arg1: i32) -> (i32, i32) {
    %c0_i32 = arith.constant 0 : i32
    %c0_i32_0 = arith.constant 0 : i32
    return %c0_i32, %arg1 : i32, i32
  }
  func.func @transform_6(%arg0: i32, %arg1: i32) -> (i32, i32) {
    %c0_i32 = arith.constant 0 : i32
    %c0_i32_0 = arith.constant 0 : i32
    return %c0_i32, %arg1 : i32, i32
  }
  func.func @transform_7(%arg0: i32, %arg1: i32) -> (i32, i32) {
    %c0_i32 = arith.constant 0 : i32
    return %arg0, %arg1 : i32, i32
  }
}

</mosaic_0001>

<llo_original>
// kernel: tpu_custom_call.1
$region0: #{tpu_custom_call.1}
  #allocation0 [shape = 'u32[]', space=smem, size = 0x4, offset = 0x4, fixed_abs, tag = 'smem constant byte address 0x4 - core index']
  #allocation1 [shape = 'u32[144,128]{1,0:T(1,128)}', space=vmem, size = 0x12000, scoped, tag = 'internal scratch']
  #allocation2 [shape = 'f32[16,32]{1,0:T(8,128)}', space=vmem, size = 0x2000, scoped, tag = 'scratch operand']
  %s0 = inlined_call_operand.hbm [shape: f32[16,32], index: 0, kind: input, shape index: {}]
  %s1 = inlined_call_operand.hbm [shape: f32[32,32], index: 1, kind: input, shape index: {}]
  %s2 = inlined_call_operand.vmem [shape: f32[1,32], index: 2, kind: input, shape index: {}]
  %s3 = inlined_call_operand.vmem [shape: f32[1,32], index: 3, kind: input, shape index: {}]
  %s4 = inlined_call_operand.vmem [shape: f32[1,32], index: 4, kind: input, shape index: {}]
  %s5 = inlined_call_operand.hbm [shape: f32[32,256], index: 5, kind: input, shape index: {}]
  %s6 = inlined_call_operand.vmem [shape: f32[1,256], index: 6, kind: input, shape index: {}]
  %s7 = inlined_call_operand.hbm [shape: f32[16,256], index: 7, kind: output, shape index: {}]
  %s8 = sld [smem:[#allocation0]]
  $region54: #{tpu_custom_call.1} parent=0
    _
  %s10 = ssub.s32 1, %s8
  %s11 = scalar_select 0, %s10, %s8
  $region1: #{tpu_custom_call.1} parent=0
    #allocation3 [shape = 'u8[8192]{0}', space=vmem, size = 0x2000, scoped, tag = 'input window, operand 0, single buffered']
    #allocation4 [shape = 's32[1]{0}', space=sflag, size = 0x4, scoped, tag = 'scoped memory for tpu_custom_call.1']
    #allocation5 [shape = 's32[1]{0}', space=sflag, size = 0x4, scoped, tag = 'scoped memory for tpu_custom_call.1']
    #allocation6 [shape = 'u8[16384]{0}', space=vmem, size = 0x4000, scoped, tag = 'input window, operand 1, single buffered']
    #allocation7 [shape = 's32[1]{0}', space=sflag, size = 0x4, scoped, tag = 'scoped memory for tpu_custom_call.1']
    #allocation8 [shape = 'u8[32768]{0}', space=vmem, size = 0x8000, scoped, tag = 'input window, operand 5, single buffered']
    #allocation9 [shape = 'u8[16384]{0}', space=vmem, size = 0x4000, scoped, tag = 'output window, operand 0, single buffered']
    %12 = vsyncpa [#allocation4], 0
    %13 = vsyncpa [#allocation7], 0
    %14 = vsyncpa [#allocation5], 0
    // Predicated region
    $region2: #{tpu_custom_call.1} parent=1 // pred_check
      _
    $region3: #{tpu_custom_call.1} parent=1 // pred_check_branch
      %16 = sbr.rel (0) target = $region5
    $region4: #{tpu_custom_call.1} parent=1 // pred_region
      %s18 = ssub.s32 256, 256
      %19 = vsyncadd [#allocation4], %s18
      %s20 = sshll.u32 [#allocation3], 4
      %s21 = int_to_ptr.vmem [resolvable:$true] %s20
      %26 = dma.hbm_to_vmem [thread:$0]  %s0, 256, %s21, [#allocation4], 128, 128, 8
    $region5: #{tpu_custom_call.1} parent=1 // pred_fallthru
      _
    // Predicated region
    $region6: #{tpu_custom_call.1} parent=1 // pred_check
      _
    $region7: #{tpu_custom_call.1} parent=1 // pred_check_branch
      %28 = sbr.rel (0) target = $region9
    $region8: #{tpu_custom_call.1} parent=1 // pred_region
      %s30 = ssub.s32 512, 512
      %31 = vsyncadd [#allocation7], %s30
      %s32 = sshll.u32 [#allocation6], 4
      %s33 = int_to_ptr.vmem [resolvable:$true] %s32
      %38 = dma.hbm_to_vmem [thread:$0]  %s1, 512, %s33, [#allocation7], 128, 128, 8
    $region9: #{tpu_custom_call.1} parent=1 // pred_fallthru
      _
    // Predicated region
    $region10: #{tpu_custom_call.1} parent=1 // pred_check
      _
    $region11: #{tpu_custom_call.1} parent=1 // pred_check_branch
      %40 = sbr.rel (0) target = $region13
    $region12: #{tpu_custom_call.1} parent=1 // pred_region
      _
    $region13: #{tpu_custom_call.1} parent=1 // pred_fallthru
      _
    // Predicated region
    $region14: #{tpu_custom_call.1} parent=1 // pred_check
      _
    $region15: #{tpu_custom_call.1} parent=1 // pred_check_branch
      %42 = sbr.rel (0) target = $region17
    $region16: #{tpu_custom_call.1} parent=1 // pred_region
      _
    $region17: #{tpu_custom_call.1} parent=1 // pred_fallthru
      _
    // Predicated region
    $region18: #{tpu_custom_call.1} parent=1 // pred_check
      _
    $region19: #{tpu_custom_call.1} parent=1 // pred_check_branch
      %44 = sbr.rel (0) target = $region21
    $region20: #{tpu_custom_call.1} parent=1 // pred_region
      _
    $region21: #{tpu_custom_call.1} parent=1 // pred_fallthru
      _
    // Predicated region
    $region22: #{tpu_custom_call.1} parent=1 // pred_check
      _
    $region23: #{tpu_custom_call.1} parent=1 // pred_check_branch
      %46 = sbr.rel (0) target = $region25
    $region24: #{tpu_custom_call.1} parent=1 // pred_region
      %s48 = ssub.s32 1024, 1024
      %49 = vsyncadd [#allocation7], %s48
      %s50 = sshll.u32 [#allocation8], 4
      %s51 = int_to_ptr.vmem [resolvable:$true] %s50
      %56 = dma.hbm_to_vmem [thread:$0]  %s5, 1024, %s51, [#allocation7], 256, 256, 16
    $region25: #{tpu_custom_call.1} parent=1 // pred_fallthru
      _
    // Predicated region
    $region26: #{tpu_custom_call.1} parent=1 // pred_check
      _
    $region27: #{tpu_custom_call.1} parent=1 // pred_check_branch
      %58 = sbr.rel (0) target = $region29
    $region28: #{tpu_custom_call.1} parent=1 // pred_region
      _
    $region29: #{tpu_custom_call.1} parent=1 // pred_fallthru
      _
    // Predicated region
    $region30: #{tpu_custom_call.1} parent=1 // pred_check
      _
    $region31: #{tpu_custom_call.1} parent=1 // pred_check_branch
      %60 = sbr.rel (0) target = $region33
    $region32: #{tpu_custom_call.1} parent=1 // pred_region
      %61 = dma.done [#allocation4], 256
    $region33: #{tpu_custom_call.1} parent=1 // pred_fallthru
      _
    // Predicated region
    $region34: #{tpu_custom_call.1} parent=1 // pred_check
      _
    $region35: #{tpu_custom_call.1} parent=1 // pred_check_branch
      %63 = sbr.rel (0) target = $region37
    $region36: #{tpu_custom_call.1} parent=1 // pred_region
      %64 = dma.done [#allocation7], 512
    $region37: #{tpu_custom_call.1} parent=1 // pred_fallthru
      _
    // Predicated region
    $region38: #{tpu_custom_call.1} parent=1 // pred_check
      _
    $region39: #{tpu_custom_call.1} parent=1 // pred_check_branch
      %66 = sbr.rel (0) target = $region41
    $region40: #{tpu_custom_call.1} parent=1 // pred_region
      %67 = dma.done [#allocation7], 1024
    $region41: #{tpu_custom_call.1} parent=1 // pred_fallthru
      _
    %p68 = scmp.eq.s32.totalorder 0, 0
    // Predicated region
    $region42: #{tpu_custom_call.1} parent=1 // pred_check
      %p69 = pneg %p68
    $region43: #{tpu_custom_call.1} parent=1 // pred_check_branch
      %71 = sbr.rel (%p69) target = $region45
    $region44: #{tpu_custom_call.1} parent=1 // pred_region
      %v72 = vld [vmem:[#allocation3] sm:$0xff]
      %v73 = vld [vmem:[#allocation3 + $0x8] sm:$0xff]
      %v74 = vld [vmem:[#allocation6] sm:$0xff]
      %v75 = vld [vmem:[#allocation6 + $0x8] sm:$0xff]
      %v76 = vld [vmem:[#allocation6 + $0x10] sm:$0xff]
      %v77 = vld [vmem:[#allocation6 + $0x18] sm:$0xff]
      %v78 = vld [vmem:[%s2] sm:$0x1]
      %v80 = vlaneseq
      %v81 = vshrl.u32 %v80, 7
      %v82 = vsub.s32 0, %v81
      %v83 = vrot.slane %v78, %v82
      %vm85 = vcmask 261120
      %v87 = vsel %vm85, %v72, 0
      %v90 = vsel %vm85, %v73, 0
      %92 = vmatprep.subr.mxu0 0.0
      %93 = vmatpush1.msra.mxu0 0.0
      %94 = vmatprep.subr.mxu0 0.0
      %95 = vmatpush1.msra.mxu0 0.0
      %96 = vmatprep.subr.mxu0 0.0
      %97 = vmatpush1.msra.mxu0 0.0
      %98 = vmatprep.subr.mxu0 0.0
      %99 = vmatpush1.msra.mxu0 0.0
      %100 = vmatprep.subr.mxu0 0.0
      %101 = vmatpush1.msra.mxu0 0.0
      %102 = vmatprep.subr.mxu0 0.0
      %103 = vmatpush1.msra.mxu0 0.0
      %104 = vmatprep.subr.mxu0 0.0
      %105 = vmatpush1.msra.mxu0 0.0
      %106 = vmatprep.subr.mxu0 0.0
      %107 = vmatpush1.msra.mxu0 0.0
      %108 = vmatprep.subr.mxu0 0.0
      %109 = vmatpush1.msra.mxu0 0.0
      %110 = vmatprep.subr.mxu0 0.0
      %111 = vmatpush1.msra.mxu0 0.0
      %112 = vmatprep.subr.mxu0 0.0
      %113 = vmatpush1.msra.mxu0 0.0
      %114 = vmatprep.subr.mxu0 0.0
      %115 = vmatpush1.msra.mxu0 0.0
      %116 = vmatprep.subr.mxu0 0.0
      %117 = vmatpush1.msra.mxu0 %v77
      %118 = vmatprep.subr.mxu0 0.0
      %119 = vmatpush1.msra.mxu0 %v76
      %120 = vmatprep.subr.mxu0 0.0
      %121 = vmatpush1.msra.mxu0 %v75
      %122 = vmatprep.subr.mxu0 0.0
      %123 = vmatpush1.msra.mxu0 %v74
      %124 = vmatprep.subr.mxu0 0.0
      %125 = vmatpush2.msra.mxu0 0.0
      %126 = vmatprep.subr.mxu0 0.0
      %127 = vmatpush2.msra.mxu0 0.0
      %128 = vmatprep.subr.mxu0 0.0
      %129 = vmatpush2.msra.mxu0 0.0
      %130 = vmatprep.subr.mxu0 0.0
      %131 = vmatpush2.msra.mxu0 0.0
      %132 = vmatprep.subr.mxu0 0.0
      %133 = vmatpush2.msra.mxu0 0.0
      %134 = vmatprep.subr.mxu0 0.0
      %135 = vmatpush2.msra.mxu0 0.0
      %136 = vmatprep.subr.mxu0 0.0
      %137 = vmatpush2.msra.mxu0 0.0
      %138 = vmatprep.subr.mxu0 0.0
      %139 = vmatpush2.msra.mxu0 0.0
      %140 = vmatprep.subr.mxu0 0.0
      %141 = vmatpush2.msra.mxu0 0.0
      %142 = vmatprep.subr.mxu0 0.0
      %143 = vmatpush2.msra.mxu0 0.0
      %144 = vmatprep.subr.mxu0 0.0
      %145 = vmatpush2.msra.mxu0 0.0
      %146 = vmatprep.subr.mxu0 0.0
      %147 = vmatpush2.msra.mxu0 0.0
      %148 = vmatprep.subr.mxu0 0.0
      %149 = vmatpush2.msra.mxu0 0.0
      %150 = vmatprep.subr.mxu0 0.0
      %151 = vmatpush2.msra.mxu0 0.0
      %152 = vmatprep.subr.mxu0 0.0
      %153 = vmatpush2.msra.mxu0 0.0
      %154 = vmatprep.subr.mxu0 0.0
      %155 = vmatpush2.msra.mxu0 0.0
      %156 = vmatprep.mubr.f32.mxu0 0.0
      %157 = vmatmul.mubr.f32.gmra.mxu0 %v87
      %v158 = vpop.f32.mrf.mxu0
      %v159 = vadd.f32 %v83, %v158
      %v160 = vpop.f32.mrf.mxu0
      %161 = vmatprep.mubr.f32.mxu0 0.0
      %162 = vmatmul.mubr.f32.gmra.mxu0 %v90
      %v163 = vpop.f32.mrf.mxu0
      %v164 = vadd.f32 %v83, %v163
      %v165 = vpop.f32.mrf.mxu0
      %166 = vdwg.mxu0
      %v167 = vmul.f32 %v159, 0.5
      %v168 = vmul.f32 %v164, 0.5
      %v169 = vmul.f32 %v159, %v159
      %v170 = vmul.f32 %v164, %v164
      %v171 = vmul.f32 %v169, %v159
      %v172 = vmul.f32 %v170, %v164
      %v173 = vmul.f32 %v171, 0.044715
      %v174 = vmul.f32 %v172, 0.044715
      %v175 = vadd.f32 %v159, %v173
      %v176 = vadd.f32 %v164, %v174
      %v177 = vmul.f32 %v175, 0.7978846
      %v178 = vmul.f32 %v176, 0.7978846
      %v179 = vtanh.pop %v177
      %v180 = vtanh.pop %v178
      %v181 = vadd.f32 %v179, 1.0
      %v182 = vadd.f32 %v180, 1.0
      %v183 = vmul.f32 %v167, %v181
      %v184 = vmul.f32 %v168, %v182
      %v185 = vsel %vm85, %v183, 0.0
      %186 = vadd.xlane.f32.xlu0 %v185
      %v187 = vpop.xlane.xlu0 %186
      %v188 = vsel %vm85, %v184, 0.0
      %189 = vadd.xlane.f32.xlu0 %v188
      %v190 = vpop.xlane.xlu0 %189
      %v191 = vrcp.pop 32.0
      %v192 = vmul.f32 %v187, %v191
      %v193 = vmul.f32 %v190, %v191
      %v194 = vsub.f32 %v183, %v192
      %v195 = vsub.f32 %v184, %v193
      %v196 = vmul.f32 %v194, %v194
      %v197 = vmul.f32 %v195, %v195
      %v198 = vsel %vm85, %v196, 0.0
      %199 = vadd.xlane.f32.xlu0 %v198
      %v200 = vpop.xlane.xlu0 %199
      %v201 = vsel %vm85, %v197, 0.0
      %202 = vadd.xlane.f32.xlu0 %v201
      %v203 = vpop.xlane.xlu0 %202
      %v204 = vmul.f32 %v200, %v191
      %v205 = vmul.f32 %v203, %v191
      %v206 = vadd.f32 %v204, 1e-12
      %v207 = vadd.f32 %v205, 1e-12
      %v208 = vrsqrt.pop %v206
      %v209 = vrsqrt.pop %v207
      %v210 = vmul.f32 %v194, %v208
      %v211 = vmul.f32 %v195, %v209
      %v212 = vld [vmem:[%s3] sm:$0x1]
      %v214 = vlaneseq
      %v215 = vshrl.u32 %v214, 7
      %v216 = vsub.s32 0, %v215
      %v217 = vrot.slane %v212, %v216
      %v219 = vmul.f32 %v210, %v217
      %v220 = vmul.f32 %v211, %v217
      %v221 = vld [vmem:[%s4] sm:$0x1]
      %v223 = vlaneseq
      %v224 = vshrl.u32 %v223, 7
      %v225 = vsub.s32 0, %v224
      %v226 = vrot.slane %v221, %v225
      %v228 = vadd.f32 %v219, %v226
      %v229 = vadd.f32 %v220, %v226
      %230 = vst.msk [vmem:[#allocation2] sm:$0xff] %vm85, %v228
      %231 = vst.msk [vmem:[#allocation2 + $0x8] sm:$0xff] %vm85, %v229
    $region45: #{tpu_custom_call.1} parent=1 // pred_fallthru
      _
    %v232 = vld [vmem:[#allocation2] sm:$0xff]
    %v233 = vld [vmem:[#allocation2 + $0x8] sm:$0xff]
    %v234 = vld [vmem:[#allocation8] sm:$0xff]
    %v235 = vld [vmem:[#allocation8 + $0x8] sm:$0xff]
    %v236 = vld [vmem:[#allocation8 + $0x10] sm:$0xff]
    %v237 = vld [vmem:[#allocation8 + $0x18] sm:$0xff]
    %v238 = vld [vmem:[#allocation8 + $0x20] sm:$0xff]
    %v239 = vld [vmem:[#allocation8 + $0x28] sm:$0xff]
    %v240 = vld [vmem:[#allocation8 + $0x30] sm:$0xff]
    %v241 = vld [vmem:[#allocation8 + $0x38] sm:$0xff]
    %v242 = vld [vmem:[%s6] sm:$0x3]
    %v244 = vlaneseq
    %v245 = vshrl.u32 %v244, 7
    %v246 = vsub.s32 0, %v245
    %v247 = vrot.slane %v242, %v246
    %v248 = vlaneseq
    %v249 = vshrl.u32 %v248, 7
    %v250 = vsub.s32 1, %v249
    %v251 = vrot.slane %v242, %v250
    %vm254 = vcmask 261120
    %v256 = vsel %vm254, %v232, 0
    %v259 = vsel %vm254, %v233, 0
    %261 = vmatprep.subr.mxu0 0.0
    %262 = vmatpush1.msra.mxu0 0.0
    %263 = vmatprep.subr.mxu0 0.0
    %264 = vmatpush1.msra.mxu0 0.0
    %265 = vmatprep.subr.mxu0 0.0
    %266 = vmatpush1.msra.mxu0 0.0
    %267 = vmatprep.subr.mxu0 0.0
    %268 = vmatpush1.msra.mxu0 0.0
    %269 = vmatprep.subr.mxu0 0.0
    %270 = vmatpush1.msra.mxu0 0.0
    %271 = vmatprep.subr.mxu0 0.0
    %272 = vmatpush1.msra.mxu0 0.0
    %273 = vmatprep.subr.mxu0 0.0
    %274 = vmatpush1.msra.mxu0 0.0
    %275 = vmatprep.subr.mxu0 0.0
    %276 = vmatpush1.msra.mxu0 0.0
    %277 = vmatprep.subr.mxu0 0.0
    %278 = vmatpush1.msra.mxu0 0.0
    %279 = vmatprep.subr.mxu0 0.0
    %280 = vmatpush1.msra.mxu0 0.0
    %281 = vmatprep.subr.mxu0 0.0
    %282 = vmatpush1.msra.mxu0 0.0
    %283 = vmatprep.subr.mxu0 0.0
    %284 = vmatpush1.msra.mxu0 0.0
    %285 = vmatprep.subr.mxu0 %v241
    %286 = vmatpush1.msra.mxu0 %v240
    %287 = vmatprep.subr.mxu0 %v239
    %288 = vmatpush1.msra.mxu0 %v238
    %289 = vmatprep.subr.mxu0 %v237
    %290 = vmatpush1.msra.mxu0 %v236
    %291 = vmatprep.subr.mxu0 %v235
    %292 = vmatpush1.msra.mxu0 %v234
    %293 = vmatprep.subr.mxu0 0.0
    %294 = vmatpush2.msra.mxu0 0.0
    %295 = vmatprep.subr.mxu0 0.0
    %296 = vmatpush2.msra.mxu0 0.0
    %297 = vmatprep.subr.mxu0 0.0
    %298 = vmatpush2.msra.mxu0 0.0
    %299 = vmatprep.subr.mxu0 0.0
    %300 = vmatpush2.msra.mxu0 0.0
    %301 = vmatprep.subr.mxu0 0.0
    %302 = vmatpush2.msra.mxu0 0.0
    %303 = vmatprep.subr.mxu0 0.0
    %304 = vmatpush2.msra.mxu0 0.0
    %305 = vmatprep.subr.mxu0 0.0
    %306 = vmatpush2.msra.mxu0 0.0
    %307 = vmatprep.subr.mxu0 0.0
    %308 = vmatpush2.msra.mxu0 0.0
    %309 = vmatprep.subr.mxu0 0.0
    %310 = vmatpush2.msra.mxu0 0.0
    %311 = vmatprep.subr.mxu0 0.0
    %312 = vmatpush2.msra.mxu0 0.0
    %313 = vmatprep.subr.mxu0 0.0
    %314 = vmatpush2.msra.mxu0 0.0
    %315 = vmatprep.subr.mxu0 0.0
    %316 = vmatpush2.msra.mxu0 0.0
    %317 = vmatprep.subr.mxu0 0.0
    %318 = vmatpush2.msra.mxu0 0.0
    %319 = vmatprep.subr.mxu0 0.0
    %320 = vmatpush2.msra.mxu0 0.0
    %321 = vmatprep.subr.mxu0 0.0
    %322 = vmatpush2.msra.mxu0 0.0
    %323 = vmatprep.subr.mxu0 0.0
    %324 = vmatpush2.msra.mxu0 0.0
    %325 = vmatprep.mubr.f32.mxu0 0.0
    %326 = vmatmul.mubr.f32.gmra.mxu0 %v256
    %v327 = vpop.f32.mrf.mxu0
    %v328 = vadd.f32 %v247, %v327
    %v329 = vpop.f32.mrf.mxu0
    %v330 = vadd.f32 %v251, %v329
    %331 = vmatprep.mubr.f32.mxu0 0.0
    %332 = vmatmul.mubr.f32.gmra.mxu0 %v259
    %v333 = vpop.f32.mrf.mxu0
    %v334 = vadd.f32 %v247, %v333
    %v335 = vpop.f32.mrf.mxu0
    %v336 = vadd.f32 %v251, %v335
    %337 = vdwg.mxu0
    %338 = vst [vmem:[#allocation9] sm:$0xff] %v328
    %339 = vst [vmem:[#allocation9 + $0x8] sm:$0xff] %v330
    %340 = vst [vmem:[#allocation9 + $0x10] sm:$0xff] %v334
    %341 = vst [vmem:[#allocation9 + $0x18] sm:$0xff] %v336
    // Predicated region
    $region46: #{tpu_custom_call.1} parent=1 // pred_check
      _
    $region47: #{tpu_custom_call.1} parent=1 // pred_check_branch
      %343 = sbr.rel (0) target = $region49
    $region48: #{tpu_custom_call.1} parent=1 // pred_region
      %s345 = ssub.s32 512, 512
      %346 = vsyncadd [#allocation5], %s345
      %s347 = sshll.u32 [#allocation9], 4
      %s348 = int_to_ptr.vmem [resolvable:$true] %s347
      %353 = dma.vmem_to_hbm [thread:$0]  %s348, 512, %s7, [#allocation5], 256, 256, 16
    $region49: #{tpu_custom_call.1} parent=1 // pred_fallthru
      _
    // Predicated region
    $region50: #{tpu_custom_call.1} parent=1 // pred_check
      _
    $region51: #{tpu_custom_call.1} parent=1 // pred_check_branch
      %355 = sbr.rel (0) target = $region53
    $region52: #{tpu_custom_call.1} parent=1 // pred_region
      %356 = dma.done [#allocation5], 512
    $region53: #{tpu_custom_call.1} parent=1 // pred_fallthru
      _
    %357 = vsyncpa [#allocation4], 1
    %358 = vsyncpa [#allocation7], 1
    %359 = vsyncpa [#allocation5], 1

</llo_original>
